<compile_context>
chip_gen: v7x
topology: tpu7x:2x2x1
jax: 0.10.0
libtpu: 0.0.40
codegen_flags: <defaults>
</compile_context>

<pallas_src>
import math

import jax
import jax.numpy as jnp
from jax.experimental import pallas as pl
from jax.experimental.pallas import tpu as pltpu


def _round_up(v, m):
    return ((v + m - 1) // m) * m


def _down_conv_kernel(x_ref, w_ref, b_ref, o_ref):
    """One (C_out, tm) output tile of the transposed GEMM.

    x_ref: (K, tm)      patch features, lane dim = output pixels
    w_ref: (C_out, K)   reshaped OIHW conv weight
    b_ref: (C_out, 1)   bias (f32), broadcast along lanes
    o_ref: (C_out, tm)  lane-dense output tile
    """
    acc = jnp.dot(w_ref[...], x_ref[...], preferred_element_type=jnp.float32)
    acc = acc + b_ref[...]
    acc = jnp.maximum(acc, 0.2 * acc)          # LeakyReLU(0.2): one VALU op
    o_ref[...] = acc.astype(o_ref.dtype)


def _pick_tm(M, K, Co, in_itemsize, out_itemsize,
             vmem_budget=24 * 1024 * 1024, tm_cap=2048):
    """Largest lane tile (multiple of 128) whose double-buffered footprint fits."""
    if M < 128:
        return int(M)                                   # full-dim block, tiny problem
    per_col = 2 * (K * in_itemsize + Co * out_itemsize)  # x tile + out tile, 2 buffers
    fixed = 2 * Co * (K * in_itemsize + 4)                # weight + bias, 2 buffers
    tm = (vmem_budget - fixed) // max(per_col, 1)
    tm = max(128, min(tm, tm_cap))
    tm = (tm // 128) * 128
    tm = min(tm, _round_up(M, 128))                      # never (much) larger than M
    # If everything would fit in a single grid step but the problem is big
    # enough, split into >=2 steps so "parallel" can use both v7x TensorCores.
    if tm >= M and M >= 1024:
        tm = min(tm, max(512, _round_up(pl.cdiv(M, 2), 128)))
    return int(tm)


def down_conv_block(x, weight, bias, *, compute_dtype=jnp.bfloat16, tm=None):
    """LeakyReLU(0.2)(Conv2d(C_in, C_out, kernel_size=2, stride=2, padding=0)(x)).

    x: (B, C_in, H, W) NCHW. weight: (C_out, C_in, 2, 2) OIHW. bias: (C_out,).
    Returns (B, C_out, H//2, W//2) NCHW.
    """
    B, C, H, W = x.shape
    Co = weight.shape[0]
    Ho, Wo = H // 2, W // 2
    K = 4 * C
    M = B * Ho * Wo
    out_dtype = x.dtype

    # PyTorch Conv2d(k=2, s=2, p=0) silently drops a trailing odd row/column.
    x = x[:, :, :2 * Ho, :2 * Wo]

    # Space-to-depth into a (K, M) patch matrix, K ordered (c, kh, kw) to match
    # the OIHW weight layout, M ordered (b, ho, wo).  The compute-dtype cast is
    # fused into this single relayout pass (halves the bytes written + re-read
    # when streaming bf16).
    # TODO(synk): fold this gather into the kernel via memory_space=pl.ANY +
    # strided DMA over the NCHW array to remove this extra HBM pass entirely.
    xt = (x.reshape(B, C, Ho, 2, Wo, 2)
           .transpose(1, 3, 5, 0, 2, 4)
           .reshape(K, M)
           .astype(compute_dtype))
    wm = weight.reshape(Co, K).astype(compute_dtype)      # (Co, K)
    bm = bias.astype(jnp.float32).reshape(Co, 1)          # (Co, 1)

    in_bytes = jnp.dtype(compute_dtype).itemsize
    out_bytes = jnp.dtype(out_dtype).itemsize
    if tm is None:
        tm = _pick_tm(M, K, Co, in_bytes, out_bytes)
    grid_m = pl.cdiv(M, tm)

    cost = pl.CostEstimate(
        flops=2 * M * K * Co,
        transcendentals=0,
        bytes_accessed=M * K * in_bytes + K * Co * in_bytes + M * Co * out_bytes)

    out_t = pl.pallas_call(
        _down_conv_kernel,
        out_shape=jax.ShapeDtypeStruct((Co, M), out_dtype),
        grid_spec=pltpu.PrefetchScalarGridSpec(
            num_scalar_prefetch=0,
            grid=(grid_m,),
            in_specs=[
                pl.BlockSpec((K, tm), lambda i: (0, i)),
                # Constant-index weight / bias blocks: fetched once.  They are
                # tiny here (K*Co); for very large channel counts consider
                # single-buffering them or adding a K/N grid axis + f32 acc.
                pl.BlockSpec((Co, K), lambda i: (0, 0)),
                pl.BlockSpec((Co, 1), lambda i: (0, 0)),
            ],
            out_specs=pl.BlockSpec((Co, tm), lambda i: (0, i)),
        ),
        compiler_params=pltpu.CompilerParams(
            dimension_semantics=("parallel",),
            vmem_limit_bytes=32 * 1024 * 1024),
        cost_estimate=cost,
    )(xt, wm, bm)

    # (Co, B*Ho*Wo) -> (B, Co, Ho, Wo): only the two leading axes swap; the
    # contiguous Ho*Wo inner block is untouched (much cheaper than NHWC<->NCHW).
    return out_t.reshape(Co, B, Ho, Wo).transpose(1, 0, 2, 3)


def _reference(x, weight, bias):
    y = jax.lax.conv_general_dilated(
        x, weight, window_strides=(2, 2), padding="VALID",
        dimension_numbers=("NCHW", "OIHW", "NCHW"))
    y = y + bias[None, :, None, None]
    return jnp.where(y >= 0, y, 0.2 * y)


if __name__ == "__main__":
    # Small, deterministic example consistent with the module's forward.
    B, C_in, C_out, H, W = 2, 4, 8, 16, 16

    key = jax.random.PRNGKey(0)
    kx, kw, kb = jax.random.split(key, 3)

    x = jax.random.normal(kx, (B, C_in, H, W), dtype=jnp.float32)

    # Deterministic init mimicking PyTorch Conv2d default (+/- 1/sqrt(fan_in)).
    fan_in = C_in * 2 * 2
    bound = 1.0 / math.sqrt(fan_in)
    weight = jax.random.uniform(kw, (C_out, C_in, 2, 2), jnp.float32,
                                minval=-bound, maxval=bound)
    bias = jax.random.uniform(kb, (C_out,), jnp.float32,
                              minval=-bound, maxval=bound)

    ref = _reference(x, weight, bias)

    # Exact-math path (f32 streaming): tight check of the kernel logic.
    out_f32 = jax.block_until_ready(
        down_conv_block(x, weight, bias, compute_dtype=jnp.float32))
    assert out_f32.shape == (B, C_out, H // 2, W // 2), out_f32.shape
    assert jnp.allclose(out_f32, ref, atol=1e-5, rtol=1e-5), "f32 path mismatch"

    # Default perf path (bf16 streaming, f32 accumulate): looser tolerance.
    out = jax.block_until_ready(down_conv_block(x, weight, bias))
    assert out.shape == (B, C_out, H // 2, W // 2), out.shape
    assert jnp.allclose(out, ref, atol=5e-2, rtol=5e-2), "bf16 path mismatch"

    print("KERNEL_OK")
</pallas_src>

<mosaic_0001>
module attributes {stable_mosaic.version = 11 : i64} {
  func.func @_down_conv_kernel(%arg0: i32, %arg1: memref<16x128xf32, #tpu.memory_space<vmem>>, %arg2: memref<8x16xf32, #tpu.memory_space<vmem>>, %arg3: memref<8x1xf32, #tpu.memory_space<vmem>>, %arg4: memref<8x128xf32, #tpu.memory_space<vmem>>) attributes {dimension_semantics = [#tpu.dimension_semantics<parallel>], iteration_bounds = array<i64: 1>, scalar_prefetch = 0 : i64, scratch_operands = 0 : i64, tpu.core_type = #tpu.core_type<tc>, window_params = [{transform_indices = @transform_0, window_bounds = array<i64: 16, 128>}, {pipeline_mode = #tpu.pipeline_mode<synchronous>, transform_indices = @transform_1, window_bounds = array<i64: 8, 16>}, {pipeline_mode = #tpu.pipeline_mode<synchronous>, transform_indices = @transform_2, window_bounds = array<i64: 8, 1>}, {transform_indices = @transform_3, window_bounds = array<i64: 8, 128>}]} {
    %c0 = arith.constant 0 : index
    %c0_0 = arith.constant 0 : index
    %0 = vector.load %arg2[%c0, %c0_0] : memref<8x16xf32, #tpu.memory_space<vmem>>, vector<8x16xf32>
    %c0_1 = arith.constant 0 : index
    %c0_2 = arith.constant 0 : index
    %1 = vector.load %arg1[%c0_1, %c0_2] : memref<16x128xf32, #tpu.memory_space<vmem>>, vector<16x128xf32>
    %cst = arith.constant dense<0.000000e+00> : vector<8x128xf32>
    %2 = tpu.matmul %0, %1, %cst {dimension_numbers = #tpu.dot_dimension_numbers<[1], [0], [0], [1], [0, 0, 1, 1], [], []>} : vector<8x16xf32>, vector<16x128xf32>, vector<8x128xf32> -> vector<8x128xf32>
    %c0_3 = arith.constant 0 : index
    %c0_4 = arith.constant 0 : index
    %3 = vector.load %arg3[%c0_3, %c0_4] : memref<8x1xf32, #tpu.memory_space<vmem>>, vector<8x1xf32>
    %4 = vector.broadcast %3 : vector<8x1xf32> to vector<8x128xf32>
    %5 = arith.addf %2, %4 : vector<8x128xf32>
    %cst_5 = arith.constant 2.000000e-01 : f32
    %6 = vector.broadcast %cst_5 : f32 to vector<8x128xf32>
    %7 = arith.mulf %6, %5 : vector<8x128xf32>
    %8 = arith.maximumf %5, %7 : vector<8x128xf32>
    %c0_6 = arith.constant 0 : index
    %c0_7 = arith.constant 0 : index
    %9 = vector.load %arg4[%c0_6, %c0_7] : memref<8x128xf32, #tpu.memory_space<vmem>>, vector<8x128xf32>
    tpu.vector_store %arg4[%c0_6, %c0_7], %8 {strides = array<i32>} : memref<8x128xf32, #tpu.memory_space<vmem>>, vector<8x128xf32>,
    return
  }
  func.func @transform_0(%arg0: i32) -> (i32, i32) {
    %c0_i32 = arith.constant 0 : i32
    %c0_i32_0 = arith.constant 0 : i32
    return %c0_i32, %arg0 : i32, i32
  }
  func.func @transform_1(%arg0: i32) -> (i32, i32) {
    %c0_i32 = arith.constant 0 : i32
    %c0_i32_0 = arith.constant 0 : i32
    %c0_i32_1 = arith.constant 0 : i32
    return %c0_i32, %c0_i32_0 : i32, i32
  }
  func.func @transform_2(%arg0: i32) -> (i32, i32) {
    %c0_i32 = arith.constant 0 : i32
    %c0_i32_0 = arith.constant 0 : i32
    %c0_i32_1 = arith.constant 0 : i32
    return %c0_i32, %c0_i32_0 : i32, i32
  }
  func.func @transform_3(%arg0: i32) -> (i32, i32) {
    %c0_i32 = arith.constant 0 : i32
    %c0_i32_0 = arith.constant 0 : i32
    return %c0_i32, %arg0 : i32, i32
  }
}

</mosaic_0001>

<llo_original>
// kernel: tpu_custom_call.1
$region0: #{tpu_custom_call.1}
  #allocation0 [shape = 'u32[]', space=smem, size = 0x4, offset = 0x4, fixed_abs, tag = 'smem constant byte address 0x4 - core index']
  #allocation1 [shape = 'u32[144,128]{1,0:T(1,128)}', space=vmem, size = 0x12000, scoped, tag = 'internal scratch']
  %s0 = inlined_call_operand.hbm [shape: f32[16,128], index: 0, kind: input, shape index: {}]
  %s1 = inlined_call_operand.vmem [shape: f32[8,16], index: 1, kind: input, shape index: {}]
  %s2 = inlined_call_operand.vmem [shape: f32[8,1], index: 2, kind: input, shape index: {}]
  %s3 = inlined_call_operand.hbm [shape: f32[8,128], index: 3, kind: output, shape index: {}]
  %s4 = sld [smem:[#allocation0]]
  $region26: #{tpu_custom_call.1} parent=0
    _
  %s6 = ssub.s32 1, %s4
  %s7 = scalar_select 0, %s6, %s4
  $region1: #{tpu_custom_call.1} parent=0
    #allocation2 [shape = 'u8[8192]{0}', space=vmem, size = 0x2000, scoped, tag = 'input window, operand 0, single buffered']
    #allocation3 [shape = 's32[1]{0}', space=sflag, size = 0x4, scoped, tag = 'scoped memory for tpu_custom_call.1']
    #allocation4 [shape = 's32[1]{0}', space=sflag, size = 0x4, scoped, tag = 'scoped memory for tpu_custom_call.1']
    #allocation5 [shape = 'u8[4096]{0}', space=vmem, size = 0x1000, scoped, tag = 'output window, operand 0, single buffered']
    %8 = vsyncpa [#allocation3], 0
    %9 = vsyncpa [#allocation4], 0
    // Predicated region
    $region2: #{tpu_custom_call.1} parent=1 // pred_check
      _
    $region3: #{tpu_custom_call.1} parent=1 // pred_check_branch
      %11 = sbr.rel (0) target = $region5
    $region4: #{tpu_custom_call.1} parent=1 // pred_region
      %s13 = ssub.s32 256, 256
      %14 = vsyncadd [#allocation3], %s13
      %s15 = sshll.u32 [#allocation2], 4
      %s16 = int_to_ptr.vmem [resolvable:$true] %s15
      %21 = dma.hbm_to_vmem [thread:$0]  %s0, 256, %s16, [#allocation3], 128, 128, 8
    $region5: #{tpu_custom_call.1} parent=1 // pred_fallthru
      _
    // Predicated region
    $region6: #{tpu_custom_call.1} parent=1 // pred_check
      _
    $region7: #{tpu_custom_call.1} parent=1 // pred_check_branch
      %23 = sbr.rel (0) target = $region9
    $region8: #{tpu_custom_call.1} parent=1 // pred_region
      _
    $region9: #{tpu_custom_call.1} parent=1 // pred_fallthru
      _
    // Predicated region
    $region10: #{tpu_custom_call.1} parent=1 // pred_check
      _
    $region11: #{tpu_custom_call.1} parent=1 // pred_check_branch
      %25 = sbr.rel (0) target = $region13
    $region12: #{tpu_custom_call.1} parent=1 // pred_region
      _
    $region13: #{tpu_custom_call.1} parent=1 // pred_fallthru
      _
    // Predicated region
    $region14: #{tpu_custom_call.1} parent=1 // pred_check
      _
    $region15: #{tpu_custom_call.1} parent=1 // pred_check_branch
      %27 = sbr.rel (0) target = $region17
    $region16: #{tpu_custom_call.1} parent=1 // pred_region
      %28 = dma.done [#allocation3], 256
    $region17: #{tpu_custom_call.1} parent=1 // pred_fallthru
      _
    %v29 = vld [vmem:[%s1] sm:$0xff]
    %v30 = vld [vmem:[#allocation2] sm:$0xff]
    %v31 = vld [vmem:[#allocation2 + $0x8] sm:$0xff]
    %v32 = vld [vmem:[%s2] sm:$0xff]
    %34 = vset.pattern.permute.xlu0 0
    %35 = vperm.xlu0 %34, %v32
    %v36 = vpop.permute.xlu0 %35
    %vm38 = vcmask 130048
    %v40 = vsel %vm38, %v29, 0
    %42 = vmatprep.subr.mxu0 0.0
    %43 = vmatpush1.msra.mxu0 %v30
    %44 = vmatprep.subr.mxu0 0.0
    %45 = vmatpush1.msra.mxu0 %v31
    %46 = vmatprep.subr.mxu0 0.0
    %47 = vmatpush1.msra.mxu0 0.0
    %48 = vmatprep.subr.mxu0 0.0
    %49 = vmatpush1.msra.mxu0 0.0
    %50 = vmatprep.subr.mxu0 0.0
    %51 = vmatpush1.msra.mxu0 0.0
    %52 = vmatprep.subr.mxu0 0.0
    %53 = vmatpush1.msra.mxu0 0.0
    %54 = vmatprep.subr.mxu0 0.0
    %55 = vmatpush1.msra.mxu0 0.0
    %56 = vmatprep.subr.mxu0 0.0
    %57 = vmatpush1.msra.mxu0 0.0
    %58 = vmatprep.subr.mxu0 0.0
    %59 = vmatpush1.msra.mxu0 0.0
    %60 = vmatprep.subr.mxu0 0.0
    %61 = vmatpush1.msra.mxu0 0.0
    %62 = vmatprep.subr.mxu0 0.0
    %63 = vmatpush1.msra.mxu0 0.0
    %64 = vmatprep.subr.mxu0 0.0
    %65 = vmatpush1.msra.mxu0 0.0
    %66 = vmatprep.subr.mxu0 0.0
    %67 = vmatpush1.msra.mxu0 0.0
    %68 = vmatprep.subr.mxu0 0.0
    %69 = vmatpush1.msra.mxu0 0.0
    %70 = vmatprep.subr.mxu0 0.0
    %71 = vmatpush1.msra.mxu0 0.0
    %72 = vmatprep.subr.mxu0 0.0
    %73 = vmatpush1.msra.mxu0 0.0
    %74 = vmatprep.subr.mxu0 0.0
    %75 = vmatpush1.msra.mxu0 0.0
    %76 = vmatprep.subr.mxu0 0.0
    %77 = vmatpush1.msra.mxu0 0.0
    %78 = vmatprep.subr.mxu0 0.0
    %79 = vmatpush1.msra.mxu0 0.0
    %80 = vmatprep.subr.mxu0 0.0
    %81 = vmatpush1.msra.mxu0 0.0
    %82 = vmatprep.subr.mxu0 0.0
    %83 = vmatpush1.msra.mxu0 0.0
    %84 = vmatprep.subr.mxu0 0.0
    %85 = vmatpush1.msra.mxu0 0.0
    %86 = vmatprep.subr.mxu0 0.0
    %87 = vmatpush1.msra.mxu0 0.0
    %88 = vmatprep.subr.mxu0 0.0
    %89 = vmatpush1.msra.mxu0 0.0
    %90 = vmatprep.subr.mxu0 0.0
    %91 = vmatpush1.msra.mxu0 0.0
    %92 = vmatprep.subr.mxu0 0.0
    %93 = vmatpush1.msra.mxu0 0.0
    %94 = vmatprep.subr.mxu0 0.0
    %95 = vmatpush1.msra.mxu0 0.0
    %96 = vmatprep.subr.mxu0 0.0
    %97 = vmatpush1.msra.mxu0 0.0
    %98 = vmatprep.subr.mxu0 0.0
    %99 = vmatpush1.msra.mxu0 0.0
    %100 = vmatprep.subr.mxu0 0.0
    %101 = vmatpush1.msra.mxu0 0.0
    %102 = vmatprep.subr.mxu0 0.0
    %103 = vmatpush1.msra.mxu0 0.0
    %104 = vmatprep.subr.mxu0 0.0
    %105 = vmatpush1.msra.mxu0 0.0
    %106 = vmatprep.mubr.f32.mxu0 0.0
    %107 = vmatmul.mubr.f32.gmra.mrb[0].mxu0 %v40
    %v108 = vpop.f32.mrb[0].mxu0
    %v109 = vadd.f32 %v36, %v108
    %v110 = vpop.f32.mrb[0].mxu0
    %111 = vdwg.mxu0
    %v112 = vmul.f32 %v109, 0.2
    %v113 = vmax.f32 %v109, %v112
    %114 = vst [vmem:[#allocation5] sm:$0xff] %v113
    // Predicated region
    $region18: #{tpu_custom_call.1} parent=1 // pred_check
      _
    $region19: #{tpu_custom_call.1} parent=1 // pred_check_branch
      %116 = sbr.rel (0) target = $region21
    $region20: #{tpu_custom_call.1} parent=1 // pred_region
      %s118 = ssub.s32 128, 128
      %119 = vsyncadd [#allocation4], %s118
      %s121 = sshll.u32 [#allocation5], 4
      %s122 = int_to_ptr.vmem [resolvable:$true] %s121
      %124 = dma.vmem_to_hbm [thread:$0]  %s122, 128, %s3, [#allocation4]
    $region21: #{tpu_custom_call.1} parent=1 // pred_fallthru
      _
    // Predicated region
    $region22: #{tpu_custom_call.1} parent=1 // pred_check
      _
    $region23: #{tpu_custom_call.1} parent=1 // pred_check_branch
      %126 = sbr.rel (0) target = $region25
    $region24: #{tpu_custom_call.1} parent=1 // pred_region
      %127 = dma.done [#allocation4], 128
    $region25: #{tpu_custom_call.1} parent=1 // pred_fallthru
      _
    %128 = vsyncpa [#allocation3], 1
    %129 = vsyncpa [#allocation4], 1

</llo_original>
